<compile_context>
chip_gen: v5e
topology: v5e:2x2
jax: 0.10.0
libtpu: 0.0.40
codegen_flags: <defaults>
</compile_context>

<pallas_src>
import math
import jax
import jax.numpy as jnp
from jax.experimental import pallas as pl
from jax.experimental.pallas import tpu as pltpu


# ----------------------------- helpers -----------------------------

def _pick_tile(dim, candidates):
    """Largest candidate tile that evenly divides `dim`; else the full dim."""
    for c in candidates:
        if dim >= c and dim % c == 0:
            return c
    return dim


# ----------------------- tiled linear (x @ W + b) -----------------------

def _linear_kernel(x_ref, w_ref, b_ref, o_ref, acc_ref):
    k = pl.program_id(2)

    @pl.when(k == 0)
    def _():
        acc_ref[...] = jnp.zeros_like(acc_ref)

    acc_ref[...] += jnp.dot(x_ref[...], w_ref[...],
                            preferred_element_type=jnp.float32)

    @pl.when(k == pl.num_programs(2) - 1)
    def _():
        o_ref[...] = (acc_ref[...] + b_ref[...].astype(jnp.float32)
                      ).astype(o_ref.dtype)


def linear(x2d, w, b):
    M, K = x2d.shape
    _, N = w.shape
    tm = _pick_tile(M, (512, 256, 128, 64, 32, 16, 8))
    tn = _pick_tile(N, (512, 256, 128))
    tk = _pick_tile(K, (512, 256, 128))
    return pl.pallas_call(
        _linear_kernel,
        out_shape=jax.ShapeDtypeStruct((M, N), x2d.dtype),
        grid=(M // tm, N // tn, K // tk),
        in_specs=[
            pl.BlockSpec((tm, tk), lambda i, j, k: (i, k)),
            pl.BlockSpec((tk, tn), lambda i, j, k: (k, j)),
            pl.BlockSpec((1, tn), lambda i, j, k: (0, j)),
        ],
        out_specs=pl.BlockSpec((tm, tn), lambda i, j, k: (i, j)),
        scratch_shapes=[pltpu.VMEM((tm, tn), jnp.float32)],
        compiler_params=pltpu.CompilerParams(
            dimension_semantics=("parallel", "parallel", "arbitrary")),
    )(x2d, w, b)


# ------------------- flash attention (fused RoPE, causal) -------------------

def _make_flash_kernel(tq, tkv, head_size, dot_dtype, approx_recip):
    half = head_size // 2
    use_roll = head_size >= 128 and head_size % 128 == 0

    def rot_half(x):
        # Returns [x2, x1]; the rotate_half sign is folded into the sin table.
        if use_roll:
            return pltpu.roll(x, shift=half, axis=-1)   # XLU lane rotate
        return jnp.concatenate([x[:, half:], x[:, :half]], axis=1)

    def kernel(q_ref, k_ref, v_ref, cq_ref, sq_ref, ck_ref, sk_ref,
               o_ref, m_sc, l_sc, acc_sc, qr_sc):
        qi = pl.program_id(2)
        ki = pl.program_id(3)
        # last kv block that intersects the causal triangle for this q block
        last_ki = (qi * tq + tq - 1) // tkv

        @pl.when(ki == 0)
        def _():
            m_sc[...] = jnp.full_like(m_sc, -jnp.inf)
            l_sc[...] = jnp.zeros_like(l_sc)
            acc_sc[...] = jnp.zeros_like(acc_sc)
            # RoPE the Q tile once per q block and cache it across the kv loop.
            # 1/sqrt(head_size) is pre-folded into cq/sq.
            qf = q_ref[...].astype(jnp.float32)
            qr_sc[...] = (qf * cq_ref[...]
                          + rot_half(qf) * sq_ref[...]).astype(dot_dtype)

        @pl.when(ki <= last_ki)          # skip blocks above the causal diagonal
        def _():
            kf = k_ref[...].astype(jnp.float32)
            kr = (kf * ck_ref[...] + rot_half(kf) * sk_ref[...]).astype(dot_dtype)
            qr = qr_sc[...]

            # (tq, tkv) scores for this block only (never the full (T, T))
            s = jax.lax.dot_general(qr, kr, (((1,), (1,)), ((), ())),
                                    preferred_element_type=jnp.float32)
            q_pos = qi * tq + jax.lax.broadcasted_iota(jnp.int32, (tq, tkv), 0)
            k_pos = ki * tkv + jax.lax.broadcasted_iota(jnp.int32, (tq, tkv), 1)
            s = jnp.where(q_pos >= k_pos, s, -jnp.inf)

            # online softmax (stats kept in f32 scratch)
            m_prev = m_sc[...]
            m_new = jnp.maximum(m_prev, jnp.max(s, axis=-1, keepdims=True))
            alpha = jnp.exp(m_prev - m_new)
            p = jnp.exp(s - m_new)
            l_sc[...] = alpha * l_sc[...] + jnp.sum(p, axis=-1, keepdims=True)
            acc_sc[...] = alpha * acc_sc[...] + jnp.dot(
                p.astype(v_ref.dtype), v_ref[...],
                preferred_element_type=jnp.float32)
            m_sc[...] = m_new

        @pl.when(ki == last_ki)          # finalize on the diagonal block
        def _():
            inv = pl.reciprocal(l_sc[...], approx=approx_recip)
            o_ref[...] = (acc_sc[...] * inv).astype(o_ref.dtype)

    return kernel


# ----------------------------- wrapper --------------------------------

def attention_forward(params, q_x, kv_x, cos_cached, sin_cached,
                      n_head, num_kv_heads, head_size):
    B, T, C = q_x.shape
    groups = n_head // num_kv_heads
    if kv_x is None:
        kv_x = q_x

    # projections (tiled Pallas matmul+bias kernels)
    # TODO(synk): when kv_x is q_x, pre-fuse wq/wk/wv into one weight matrix so
    # a single matmul kernel reads x from HBM only once.
    q = linear(q_x.reshape(B * T, C), params["wq"], params["bq"])
    k = linear(kv_x.reshape(B * T, C), params["wk"], params["bk"])
    v = linear(kv_x.reshape(B * T, C), params["wv"], params["bv"])

    q = jnp.transpose(q.reshape(B, T, n_head, head_size), (0, 2, 1, 3))       # (B,H,T,hs)
    k = jnp.transpose(k.reshape(B, T, num_kv_heads, head_size), (0, 2, 1, 3)) # (B,kvH,T,hs)
    v = jnp.transpose(v.reshape(B, T, num_kv_heads, head_size), (0, 2, 1, 3))

    # RoPE tables: rotate_half sign folded into sin; softmax scale folded into
    # the q-side tables so the kernel has no extra per-element scaling.
    half = head_size // 2
    sign = jnp.concatenate([-jnp.ones((half,), jnp.float32),
                            jnp.ones((half,), jnp.float32)])
    cos_t = cos_cached[:T].astype(jnp.float32)
    sin_t = sin_cached[:T].astype(jnp.float32) * sign[None, :]
    scale = 1.0 / math.sqrt(head_size)
    cos_q, sin_q = cos_t * scale, sin_t * scale
    cos_k, sin_k = cos_t, sin_t

    tq = _pick_tile(T, (128, 64, 32, 16, 8))
    tkv = tq
    nq, nkv = T // tq, T // tkv

    dot_dtype = jnp.bfloat16 if q.dtype == jnp.bfloat16 else jnp.float32
    kernel = _make_flash_kernel(tq, tkv, head_size, dot_dtype,
                                approx_recip=(dot_dtype == jnp.bfloat16))

    def _clamp_kv(i, j):
        # clamp kv block index to the causal range so skipped (masked) blocks
        # keep the same block index -> no extra DMA for them.
        return jnp.minimum(j, (i * tq + tq - 1) // tkv)

    kv_map = lambda b, h, i, j: (b, h // groups, _clamp_kv(i, j), 0)  # GQA repeat_kv
    rope_k_map = lambda b, h, i, j: (_clamp_kv(i, j), 0)

    y = pl.pallas_call(
        kernel,
        out_shape=jax.ShapeDtypeStruct((B, n_head, T, head_size), q.dtype),
        grid=(B, n_head, nq, nkv),
        in_specs=[
            pl.BlockSpec((None, None, tq, head_size), lambda b, h, i, j: (b, h, i, 0)),
            pl.BlockSpec((None, None, tkv, head_size), kv_map),
            pl.BlockSpec((None, None, tkv, head_size), kv_map),
            pl.BlockSpec((tq, head_size), lambda b, h, i, j: (i, 0)),
            pl.BlockSpec((tq, head_size), lambda b, h, i, j: (i, 0)),
            pl.BlockSpec((tkv, head_size), rope_k_map),
            pl.BlockSpec((tkv, head_size), rope_k_map),
        ],
        out_specs=pl.BlockSpec((None, None, tq, head_size),
                               lambda b, h, i, j: (b, h, i, 0)),
        scratch_shapes=[
            pltpu.VMEM((tq, 1), jnp.float32),            # running max
            pltpu.VMEM((tq, 1), jnp.float32),            # running denom
            pltpu.VMEM((tq, head_size), jnp.float32),    # output accumulator
            pltpu.VMEM((tq, head_size), dot_dtype),      # cached RoPE'd Q tile
        ],
        compiler_params=pltpu.CompilerParams(
            dimension_semantics=("parallel", "parallel", "parallel", "arbitrary")),
    )(q, k, v, cos_q, sin_q, cos_k, sin_k)

    # TODO(synk): emit y directly in a lane-dense (B, T, H*hs) layout from the
    # kernel (process a group of heads per grid step) to remove this transpose.
    y = jnp.transpose(y, (0, 2, 1, 3)).reshape(B, T, n_head * head_size)
    out = linear(y.reshape(B * T, n_head * head_size), params["wc"], params["bc"])
    return out.reshape(B, T, C).astype(q_x.dtype)


# ----------------------------- setup helpers -----------------------------

def build_rope_cache(head_size, max_seq_len, base=10000.0, scale=1.0):
    inv_freq = 1.0 / (scale * base ** (
        jnp.arange(0, head_size, 2, dtype=jnp.float32) / head_size))
    t = jnp.arange(max_seq_len, dtype=jnp.float32)
    freqs = jnp.outer(t, inv_freq)
    emb = jnp.concatenate([freqs, freqs], axis=-1)
    return jnp.cos(emb), jnp.sin(emb)


def init_params(key, n_embd, n_head, num_kv_heads, head_size, std=0.02):
    ks = jax.random.split(key, 8)

    def tn(k, shape):
        return jax.random.truncated_normal(k, -2.0, 2.0, shape, jnp.float32) * std

    # weights stored already transposed: (in_features, out_features)
    return {
        "wq": tn(ks[0], (n_embd, n_head * head_size)),
        "bq": tn(ks[1], (1, n_head * head_size)),
        "wk": tn(ks[2], (n_embd, num_kv_heads * head_size)),
        "bk": tn(ks[3], (1, num_kv_heads * head_size)),
        "wv": tn(ks[4], (n_embd, num_kv_heads * head_size)),
        "bv": tn(ks[5], (1, num_kv_heads * head_size)),
        "wc": tn(ks[6], (n_head * head_size, n_embd)),
        "bc": tn(ks[7], (1, n_embd)),
    }


# ----------------------------- pure-JAX reference -----------------------------

def reference_forward(params, q_x, kv_x, cos_cached, sin_cached,
                      n_head, num_kv_heads, head_size):
    B, T, C = q_x.shape
    groups = n_head // num_kv_heads
    if kv_x is None:
        kv_x = q_x
    q = q_x @ params["wq"] + params["bq"]
    k = kv_x @ params["wk"] + params["bk"]
    v = kv_x @ params["wv"] + params["bv"]
    q = jnp.transpose(q.reshape(B, T, n_head, head_size), (0, 2, 1, 3))
    k = jnp.transpose(k.reshape(B, T, num_kv_heads, head_size), (0, 2, 1, 3))
    v = jnp.transpose(v.reshape(B, T, num_kv_heads, head_size), (0, 2, 1, 3))

    cos = cos_cached[None, None, :T]
    sin = sin_cached[None, None, :T]

    def rot_half(x):
        h = x.shape[-1] // 2
        return jnp.concatenate([-x[..., h:], x[..., :h]], axis=-1)

    q = q * cos + rot_half(q) * sin
    k = k * cos + rot_half(k) * sin

    # repeat_kv
    k = jnp.repeat(k, groups, axis=1)
    v = jnp.repeat(v, groups, axis=1)

    s = jnp.einsum("bhqd,bhkd->bhqk", q, k) / math.sqrt(head_size)
    mask = jnp.tril(jnp.ones((T, T), dtype=bool))
    s = jnp.where(mask[None, None], s, -jnp.inf)
    p = jax.nn.softmax(s, axis=-1)
    y = jnp.einsum("bhqk,bhkd->bhqd", p, v)
    y = jnp.transpose(y, (0, 2, 1, 3)).reshape(B, T, n_head * head_size)
    return y @ params["wc"] + params["bc"]


# ----------------------------- main -----------------------------

if __name__ == "__main__":
    # small config consistent with the module
    B, T = 2, 8
    n_embd = 32
    n_head = 4
    num_kv_heads = 2
    head_size = 8
    block_size = 16

    key = jax.random.PRNGKey(0)
    kp, kx = jax.random.split(key)
    params = init_params(kp, n_embd, n_head, num_kv_heads, head_size)
    q_x = jax.random.normal(kx, (B, T, n_embd), dtype=jnp.float32)
    kv_x = q_x  # self-attention

    cos_cached, sin_cached = build_rope_cache(head_size, block_size)

    out = attention_forward(params, q_x, kv_x, cos_cached, sin_cached,
                            n_head, num_kv_heads, head_size)
    out = jax.block_until_ready(out)

    ref = reference_forward(params, q_x, kv_x, cos_cached, sin_cached,
                            n_head, num_kv_heads, head_size)
    assert out.shape == (B, T, n_embd)
    assert jnp.allclose(out, ref, atol=5e-4, rtol=5e-4), "mismatch vs reference"

    print("KERNEL_OK")
</pallas_src>

<mosaic_0001>
module attributes {stable_mosaic.version = 11 : i64} {
  func.func @_linear_kernel(%arg0: i32, %arg1: i32, %arg2: i32, %arg3: memref<16x32xf32, #tpu.memory_space<vmem>>, %arg4: memref<32x32xf32, #tpu.memory_space<vmem>>, %arg5: memref<1x32xf32, #tpu.memory_space<vmem>>, %arg6: memref<16x32xf32, #tpu.memory_space<vmem>>, %arg7: memref<16x32xf32, #tpu.memory_space<vmem>>) attributes {dimension_semantics = [#tpu.dimension_semantics<parallel>, #tpu.dimension_semantics<parallel>, #tpu.dimension_semantics<arbitrary>], iteration_bounds = array<i64: 1, 1, 1>, scalar_prefetch = 0 : i64, scratch_operands = 1 : i64, tpu.core_type = #tpu.core_type<tc>, window_params = [{transform_indices = @transform_0, window_bounds = array<i64: 16, 32>}, {transform_indices = @transform_1, window_bounds = array<i64: 32, 32>}, {transform_indices = @transform_2, window_bounds = array<i64: 1, 32>}, {transform_indices = @transform_3, window_bounds = array<i64: 16, 32>}]} {
    %c0_i32 = arith.constant 0 : i32
    %0 = arith.cmpi eq, %arg2, %c0_i32 : i32
    %1 = arith.extui %0 : i1 to i32
    %c0_i32_0 = arith.constant 0 : i32
    %2 = arith.cmpi ne, %1, %c0_i32_0 : i32
    scf.if %2 {
      %cst_10 = arith.constant 0.000000e+00 : f32
      %12 = vector.broadcast %cst_10 : f32 to vector<16x32xf32>
      %c0_11 = arith.constant 0 : index
      %c0_12 = arith.constant 0 : index
      %13 = vector.load %arg7[%c0_11, %c0_12] : memref<16x32xf32, #tpu.memory_space<vmem>>, vector<16x32xf32>
      tpu.vector_store %arg7[%c0_11, %c0_12], %12 {strides = array<i32>} : memref<16x32xf32, #tpu.memory_space<vmem>>, vector<16x32xf32>,
    } else {
    }
    %c0 = arith.constant 0 : index
    %c0_1 = arith.constant 0 : index
    %3 = vector.load %arg7[%c0, %c0_1] : memref<16x32xf32, #tpu.memory_space<vmem>>, vector<16x32xf32>
    %c0_2 = arith.constant 0 : index
    %c0_3 = arith.constant 0 : index
    %4 = vector.load %arg3[%c0_2, %c0_3] : memref<16x32xf32, #tpu.memory_space<vmem>>, vector<16x32xf32>
    %c0_4 = arith.constant 0 : index
    %c0_5 = arith.constant 0 : index
    %5 = vector.load %arg4[%c0_4, %c0_5] : memref<32x32xf32, #tpu.memory_space<vmem>>, vector<32x32xf32>
    %cst = arith.constant dense<0.000000e+00> : vector<16x32xf32>
    %6 = tpu.matmul %4, %5, %cst {dimension_numbers = #tpu.dot_dimension_numbers<[1], [0], [0], [1], [0, 0, 1, 1], [], []>} : vector<16x32xf32>, vector<32x32xf32>, vector<16x32xf32> -> vector<16x32xf32>
    %7 = arith.addf %3, %6 : vector<16x32xf32>
    %c0_6 = arith.constant 0 : index
    %c0_7 = arith.constant 0 : index
    %8 = vector.load %arg7[%c0_6, %c0_7] : memref<16x32xf32, #tpu.memory_space<vmem>>, vector<16x32xf32>
    tpu.vector_store %arg7[%c0_6, %c0_7], %7 {strides = array<i32>} : memref<16x32xf32, #tpu.memory_space<vmem>>, vector<16x32xf32>,
    %c0_i32_8 = arith.constant 0 : i32
    %9 = arith.cmpi eq, %arg2, %c0_i32_8 : i32
    %10 = arith.extui %9 : i1 to i32
    %c0_i32_9 = arith.constant 0 : i32
    %11 = arith.cmpi ne, %10, %c0_i32_9 : i32
    scf.if %11 {
      %c0_10 = arith.constant 0 : index
      %c0_11 = arith.constant 0 : index
      %12 = vector.load %arg7[%c0_10, %c0_11] : memref<16x32xf32, #tpu.memory_space<vmem>>, vector<16x32xf32>
      %c0_12 = arith.constant 0 : index
      %c0_13 = arith.constant 0 : index
      %13 = vector.load %arg5[%c0_12, %c0_13] : memref<1x32xf32, #tpu.memory_space<vmem>>, vector<1x32xf32>
      %14 = vector.broadcast %13 : vector<1x32xf32> to vector<16x32xf32>
      %15 = arith.addf %12, %14 : vector<16x32xf32>
      %c0_14 = arith.constant 0 : index
      %c0_15 = arith.constant 0 : index
      %16 = vector.load %arg6[%c0_14, %c0_15] : memref<16x32xf32, #tpu.memory_space<vmem>>, vector<16x32xf32>
      tpu.vector_store %arg6[%c0_14, %c0_15], %15 {strides = array<i32>} : memref<16x32xf32, #tpu.memory_space<vmem>>, vector<16x32xf32>,
    } else {
    }
    return
  }
  func.func @transform_0(%arg0: i32, %arg1: i32, %arg2: i32) -> (i32, i32) {
    %c0_i32 = arith.constant 0 : i32
    return %arg0, %arg2 : i32, i32
  }
  func.func @transform_1(%arg0: i32, %arg1: i32, %arg2: i32) -> (i32, i32) {
    %c0_i32 = arith.constant 0 : i32
    return %arg2, %arg1 : i32, i32
  }
  func.func @transform_2(%arg0: i32, %arg1: i32, %arg2: i32) -> (i32, i32) {
    %c0_i32 = arith.constant 0 : i32
    %c0_i32_0 = arith.constant 0 : i32
    return %c0_i32, %arg1 : i32, i32
  }
  func.func @transform_3(%arg0: i32, %arg1: i32, %arg2: i32) -> (i32, i32) {
    %c0_i32 = arith.constant 0 : i32
    return %arg0, %arg1 : i32, i32
  }
}

</mosaic_0001>

<llo_original>
// kernel: tpu_custom_call.1
$region0: #{tpu_custom_call.1}
  #allocation0 [shape = 'u32[]', space=smem, size = 0x4, offset = 0x4, fixed_abs, tag = 'smem constant byte address 0x4 - core index']
  #allocation1 [shape = 'u32[72,128]{1,0:T(1,128)}', space=vmem, size = 0x9000, scoped, tag = 'internal scratch']
  #allocation2 [shape = 'f32[16,32]{1,0:T(8,128)}', space=vmem, size = 0x2000, scoped, tag = 'scratch operand']
  %s0 = inlined_call_operand.hbm [shape: f32[16,32], index: 0, kind: input, shape index: {}]
  %s1 = inlined_call_operand.hbm [shape: f32[32,32], index: 1, kind: input, shape index: {}]
  %s2 = inlined_call_operand.vmem [shape: f32[1,32], index: 2, kind: input, shape index: {}]
  %s3 = inlined_call_operand.hbm [shape: f32[16,32], index: 3, kind: output, shape index: {}]
  %s4 = sld [smem:[#allocation0]]
  $region38: #{tpu_custom_call.1} parent=0
    _
  %s6 = ssub.s32 1, %s4
  %s7 = scalar_select 0, %s6, %s4
  $region1: #{tpu_custom_call.1} parent=0
    #allocation3 [shape = 'u8[8192]{0}', space=vmem, size = 0x2000, scoped, tag = 'input window, operand 0, single buffered']
    #allocation4 [shape = 's32[1]{0}', space=sflag, size = 0x4, scoped, tag = 'scoped memory for tpu_custom_call.1']
    #allocation5 [shape = 's32[1]{0}', space=sflag, size = 0x4, scoped, tag = 'scoped memory for tpu_custom_call.1']
    #allocation6 [shape = 'u8[16384]{0}', space=vmem, size = 0x4000, scoped, tag = 'input window, operand 1, single buffered']
    #allocation7 [shape = 's32[1]{0}', space=sflag, size = 0x4, scoped, tag = 'scoped memory for tpu_custom_call.1']
    #allocation8 [shape = 'u8[8192]{0}', space=vmem, size = 0x2000, scoped, tag = 'output window, operand 0, single buffered']
    %8 = vsyncpa [#allocation4], 0
    %9 = vsyncpa [#allocation7], 0
    %10 = vsyncpa [#allocation5], 0
    // Predicated region
    $region2: #{tpu_custom_call.1} parent=1 // pred_check
      _
    $region3: #{tpu_custom_call.1} parent=1 // pred_check_branch
      %12 = sbr.rel (0) target = $region5
    $region4: #{tpu_custom_call.1} parent=1 // pred_region
      %14 = vsyncadd [#allocation4], 0
      %s15 = sshll.u32 %s0, 4
      %s16 = int_to_ptr.hbm [resolvable:$true] %s15
      %s17 = sshll.u32 [#allocation3], 4
      %s18 = int_to_ptr.vmem [resolvable:$true] %s17
      %23 = dma.hbm_to_vmem [thread:$0]  %s16, 256, %s18, [#allocation4], 128, 128, 8
    $region5: #{tpu_custom_call.1} parent=1 // pred_fallthru
      _
    // Predicated region
    $region6: #{tpu_custom_call.1} parent=1 // pred_check
      _
    $region7: #{tpu_custom_call.1} parent=1 // pred_check_branch
      %25 = sbr.rel (0) target = $region9
    $region8: #{tpu_custom_call.1} parent=1 // pred_region
      %27 = vsyncadd [#allocation7], 0
      %s28 = sshll.u32 %s1, 4
      %s29 = int_to_ptr.hbm [resolvable:$true] %s28
      %s30 = sshll.u32 [#allocation6], 4
      %s31 = int_to_ptr.vmem [resolvable:$true] %s30
      %36 = dma.hbm_to_vmem [thread:$0]  %s29, 512, %s31, [#allocation7], 128, 128, 8
    $region9: #{tpu_custom_call.1} parent=1 // pred_fallthru
      _
    // Predicated region
    $region10: #{tpu_custom_call.1} parent=1 // pred_check
      _
    $region11: #{tpu_custom_call.1} parent=1 // pred_check_branch
      %38 = sbr.rel (0) target = $region13
    $region12: #{tpu_custom_call.1} parent=1 // pred_region
      _
    $region13: #{tpu_custom_call.1} parent=1 // pred_fallthru
      _
    // Predicated region
    $region14: #{tpu_custom_call.1} parent=1 // pred_check
      _
    $region15: #{tpu_custom_call.1} parent=1 // pred_check_branch
      %40 = sbr.rel (0) target = $region17
    $region16: #{tpu_custom_call.1} parent=1 // pred_region
      %42 = dma.done [#allocation4], 256
    $region17: #{tpu_custom_call.1} parent=1 // pred_fallthru
      _
    // Predicated region
    $region18: #{tpu_custom_call.1} parent=1 // pred_check
      _
    $region19: #{tpu_custom_call.1} parent=1 // pred_check_branch
      %44 = sbr.rel (0) target = $region21
    $region20: #{tpu_custom_call.1} parent=1 // pred_region
      %46 = dma.done [#allocation7], 512
    $region21: #{tpu_custom_call.1} parent=1 // pred_fallthru
      _
    %p47 = scmp.eq.s32.totalorder 0, 0
    // Predicated region
    $region22: #{tpu_custom_call.1} parent=1 // pred_check
      %p48 = pneg %p47
    $region23: #{tpu_custom_call.1} parent=1 // pred_check_branch
      %50 = sbr.rel (%p48) target = $region25
    $region24: #{tpu_custom_call.1} parent=1 // pred_region
      %vm51 = vcmask 261120
      %52 = vst.msk [vmem:[#allocation2] sm:$0xff] %vm51, 0.0
      %53 = vst.msk [vmem:[#allocation2 + $0x8] sm:$0xff] %vm51, 0.0
    $region25: #{tpu_custom_call.1} parent=1 // pred_fallthru
      _
    %v54 = vld [vmem:[#allocation2] sm:$0xff]
    %v55 = vld [vmem:[#allocation2 + $0x8] sm:$0xff]
    %v56 = vld [vmem:[#allocation3] sm:$0xff]
    %v57 = vld [vmem:[#allocation3 + $0x8] sm:$0xff]
    %v58 = vld [vmem:[#allocation6] sm:$0xff]
    %v59 = vld [vmem:[#allocation6 + $0x8] sm:$0xff]
    %v60 = vld [vmem:[#allocation6 + $0x10] sm:$0xff]
    %v61 = vld [vmem:[#allocation6 + $0x18] sm:$0xff]
    %vm62 = vcmask 261120
    %v64 = vsel %vm62, %v56, 0
    %v67 = vsel %vm62, %v57, 0
    %69 = vmatpush.msra.mxu0 0.0
    %70 = vmatpush.msra.mxu0 0.0
    %71 = vmatpush.msra.mxu0 0.0
    %72 = vmatpush.msra.mxu0 0.0
    %73 = vmatpush.msra.mxu0 0.0
    %74 = vmatpush.msra.mxu0 0.0
    %75 = vmatpush.msra.mxu0 0.0
    %76 = vmatpush.msra.mxu0 0.0
    %77 = vmatpush.msra.mxu0 0.0
    %78 = vmatpush.msra.mxu0 0.0
    %79 = vmatpush.msra.mxu0 0.0
    %80 = vmatpush.msra.mxu0 0.0
    %81 = vmatpush.msra.mxu0 %v61
    %82 = vmatpush.msra.mxu0 %v60
    %83 = vmatpush.msra.mxu0 %v59
    %84 = vmatpush.msra.mxu0 %v58
    %85 = vmatmul.f32.gmra.mxu0 %v64
    %v86 = vpop.f32.mrf.mxu0
    %v87 = vadd.f32 0.0, %v86
    %88 = vmatmul.f32.gmra.mxu0 %v67
    %v89 = vpop.f32.mrf.mxu0
    %v90 = vadd.f32 0.0, %v89
    %91 = vdwg.mxu0
    %v92 = vadd.f32 %v54, %v87
    %v93 = vadd.f32 %v55, %v90
    %94 = vst.msk [vmem:[#allocation2] sm:$0xff] %vm62, %v92
    %95 = vst.msk [vmem:[#allocation2 + $0x8] sm:$0xff] %vm62, %v93
    // Predicated region
    $region26: #{tpu_custom_call.1} parent=1 // pred_check
      %p96 = pneg %p47
    $region27: #{tpu_custom_call.1} parent=1 // pred_check_branch
      %98 = sbr.rel (%p96) target = $region29
    $region28: #{tpu_custom_call.1} parent=1 // pred_region
      %v99 = vld [vmem:[#allocation2] sm:$0xff]
      %v100 = vld [vmem:[#allocation2 + $0x8] sm:$0xff]
      %v101 = vld [vmem:[%s2] sm:$0x1]
      %v103 = vperm.slane %v101, 0
      %v105 = vadd.f32 %v99, %v103
      %v106 = vadd.f32 %v100, %v103
      %107 = vst.msk [vmem:[#allocation8] sm:$0xff] %vm62, %v105
      %108 = vst.msk [vmem:[#allocation8 + $0x8] sm:$0xff] %vm62, %v106
    $region29: #{tpu_custom_call.1} parent=1 // pred_fallthru
      _
    // Predicated region
    $region30: #{tpu_custom_call.1} parent=1 // pred_check
      _
    $region31: #{tpu_custom_call.1} parent=1 // pred_check_branch
      %110 = sbr.rel (0) target = $region33
    $region32: #{tpu_custom_call.1} parent=1 // pred_region
      %112 = vsyncadd [#allocation5], 0
      %s113 = sshll.u32 [#allocation8], 4
      %s114 = int_to_ptr.vmem [resolvable:$true] %s113
      %s115 = sshll.u32 %s3, 4
      %s116 = int_to_ptr.hbm [resolvable:$true] %s115
      %121 = dma.vmem_to_hbm [thread:$0]  %s114, 256, %s116, [#allocation5], 128, 128, 8
    $region33: #{tpu_custom_call.1} parent=1 // pred_fallthru
      _
    // Predicated region
    $region34: #{tpu_custom_call.1} parent=1 // pred_check
      _
    $region35: #{tpu_custom_call.1} parent=1 // pred_check_branch
      %123 = sbr.rel (0) target = $region37
    $region36: #{tpu_custom_call.1} parent=1 // pred_region
      %125 = dma.done [#allocation5], 256
    $region37: #{tpu_custom_call.1} parent=1 // pred_fallthru
      _
    %126 = vsyncpa [#allocation4], 1
    %127 = vsyncpa [#allocation7], 1
    %128 = vsyncpa [#allocation5], 1

</llo_original>
